<compile_context>
chip_gen: v7x
topology: tpu7x:2x2x1
jax: 0.10.0
libtpu: 0.0.40
codegen_flags: <defaults>
</compile_context>

<pallas_src>
import jax
import jax.numpy as jnp
from jax import lax
from jax.experimental import pallas as pl
from jax.experimental.pallas import tpu as pltpu

# ---- criterion hyper-parameters ---------------------------------------------
LAMBDA_GLOBAL = 0.01   # weight on the island loss inside the criterion
LAMBDA1 = 10.0         # weight on the pairwise-center term inside island loss
EPS = 1e-8             # cosine-similarity norm clamp
_NEG_BIG = -1.0e30     # class-lane padding value for logits (finite: avoids 0*inf)


def _cap_tb_for_vmem(tb, c_pad, d, itemsize, budget_bytes=24 << 20):
    """Halve the batch tile until the double-buffered per-step set fits VMEM."""
    def step_bytes(t):
        # double-buffered logits / features / labels tiles
        # + (up to) 2 resident copies of the padded centers + output row
        return (2 * (t * c_pad + t * d) * itemsize + 2 * t * 4
                + 2 * c_pad * d * itemsize + 2 * 128 * 4)
    while tb > 16 and step_bytes(tb) > budget_bytes:
        tb //= 2
    return max(16, (tb // 16) * 16)


def _make_partial_kernel(total_rows, tb):
    """Per-batch-tile partial sums of CE and squared center distance.

    total_rows (true B) and tb are static Python ints closed over, so the
    batch-padding mask needs no extra input array.
    """
    def kernel(logits_ref, labels_ref, feats_ref, centers_ref, out_ref):
        logits = logits_ref[...].astype(jnp.float32)      # (tb, C_pad)
        labels = labels_ref[...]                          # (tb, 1) int32
        feats = feats_ref[...].astype(jnp.float32)        # (tb, D)
        centers = centers_ref[...].astype(jnp.float32)    # (C_pad, D)

        tb_, c_pad = logits.shape

        # valid-row mask for batch padding
        row_ids = (pl.program_id(0) * tb
                   + lax.broadcasted_iota(jnp.int32, (tb_, 1), 0))
        w = (row_ids < total_rows).astype(jnp.float32)    # (tb, 1)

        # one-hot(labels) over the (padded, lane-dense) class axis
        cls_iota = lax.broadcasted_iota(jnp.int32, (tb_, c_pad), 1)
        onehot = (labels == cls_iota).astype(jnp.float32)  # (tb, C_pad)

        # ---- cross entropy rows: max + log(sum exp) - logit_target ----------
        row_max = jnp.max(logits, axis=-1, keepdims=True)              # (tb, 1)
        sum_exp = jnp.sum(jnp.exp(logits - row_max), axis=-1, keepdims=True)
        tgt_logit = jnp.sum(onehot * logits, axis=-1, keepdims=True)
        ce_rows = row_max + jnp.log(sum_exp) - tgt_logit               # (tb, 1)

        # ---- center-loss rows: exact one-hot gather, direct difference ------
        c_y = jnp.dot(onehot, centers, preferred_element_type=jnp.float32,
                      precision=lax.Precision.HIGHEST)                 # (tb, D)
        diff = feats - c_y
        ctr_rows = jnp.sum(diff * diff, axis=-1, keepdims=True)        # (tb, 1)

        # per-tile partial sums -> lane-dense 128-wide output row
        ce_part = jnp.sum(ce_rows * w, keepdims=True)                  # (1, 1)
        ctr_part = jnp.sum(ctr_rows * w, keepdims=True)                # (1, 1)
        lane = lax.broadcasted_iota(jnp.int32, (1, 128), 1)
        row = (jnp.where(lane == 0, ce_part, 0.0)
               + jnp.where(lane == 1, ctr_part, 0.0))                  # (1, 128)
        out_ref[...] = row.reshape(1, 1, 128)

    return kernel


def ce_island_criterion(logits, labels, features, centers, *, tb=512):
    """logits (B,C), labels (B,), features (B,D), centers (C,D) -> scalar loss.

    logits / features / centers may be f32 or bf16 (bf16 halves the DMA bytes;
    the kernel upcasts to f32 internally).
    """
    B, C = logits.shape
    Bf, D = features.shape
    Cc, Dc = centers.shape
    assert Bf == B and Cc == C and Dc == D, (logits.shape, features.shape,
                                             centers.shape)

    # -- shaping / padding (all static Python math) ----------------------------
    c_pad = pl.cdiv(C, 128) * 128                       # lane-dense class axis
    itemsize = max(jnp.dtype(logits.dtype).itemsize,
                   jnp.dtype(features.dtype).itemsize)
    tb_eff = max(16, min(int(tb), pl.cdiv(B, 16) * 16))
    tb_eff = (tb_eff // 16) * 16
    tb_eff = _cap_tb_for_vmem(tb_eff, c_pad, D, itemsize)
    b_pad = pl.cdiv(B, tb_eff) * tb_eff
    num_tiles = b_pad // tb_eff

    logits_p = logits
    centers_p = centers
    if c_pad != C:
        logits_p = jnp.pad(logits_p, ((0, 0), (0, c_pad - C)),
                           constant_values=_NEG_BIG)
        centers_p = jnp.pad(centers_p, ((0, c_pad - C), (0, 0)))
    feats_p = features
    labels_p = labels.astype(jnp.int32)
    if b_pad != B:
        logits_p = jnp.pad(logits_p, ((0, b_pad - B), (0, 0)))
        feats_p = jnp.pad(feats_p, ((0, b_pad - B), (0, 0)))
        labels_p = jnp.pad(labels_p, (0, b_pad - B))
    labels2d = labels_p.reshape(b_pad, 1)

    # -- batch-parallel partial sums (CE + center distance) in Pallas ----------
    partials = pl.pallas_call(
        _make_partial_kernel(total_rows=B, tb=tb_eff),
        out_shape=jax.ShapeDtypeStruct((num_tiles, 1, 128), jnp.float32),
        grid=(num_tiles,),
        in_specs=[
            pl.BlockSpec((tb_eff, c_pad), lambda i: (i, 0)),
            pl.BlockSpec((tb_eff, 1), lambda i: (i, 0)),
            pl.BlockSpec((tb_eff, D), lambda i: (i, 0)),
            pl.BlockSpec((c_pad, D), lambda i: (0, 0)),   # revisit: no re-DMA
        ],
        out_specs=pl.BlockSpec((1, 1, 128), lambda i: (i, 0, 0)),
        compiler_params=pltpu.CompilerParams(
            dimension_semantics=("parallel",)),
    )(logits_p, labels2d, feats_p, centers_p)

    inv_b = 1.0 / B
    ce_loss = jnp.sum(partials[:, 0, 0]) * inv_b
    center_loss = 0.5 * jnp.sum(partials[:, 0, 1]) * inv_b

    # -- island pairwise term: centers-only, O(C^2*D), tile-invariant ----------
    # kept as plain JAX in the wrapper (tiny; avoids per-tile recomputation and
    # TensorCore load imbalance inside the kernel).
    cf = centers.astype(jnp.float32)
    cn = cf * lax.rsqrt(jnp.maximum(jnp.sum(cf * cf, axis=-1, keepdims=True),
                                    EPS * EPS))
    sim = cn @ cn.T
    pairs = jnp.sum((1.0 - jnp.eye(C, dtype=jnp.float32)) * (sim + 1.0))

    island_loss = center_loss + LAMBDA1 * pairs
    return ce_loss + LAMBDA_GLOBAL * island_loss


def _reference(logits, labels, features, centers):
    """Pure-JAX reference for correctness check."""
    B, C = logits.shape
    logp = jax.nn.log_softmax(logits.astype(jnp.float32), axis=-1)
    ce = -jnp.mean(logp[jnp.arange(B), labels])
    c_y = centers[labels]
    center_loss = 0.5 * jnp.mean(jnp.sum((features - c_y) ** 2, axis=-1))
    cn = centers / jnp.maximum(
        jnp.linalg.norm(centers, axis=-1, keepdims=True), EPS)
    sim = cn @ cn.T
    offd = jnp.sum((1.0 - jnp.eye(C, dtype=jnp.float32)) * (sim + 1.0))
    island = center_loss + LAMBDA1 * offd
    return ce + LAMBDA_GLOBAL * island


if __name__ == "__main__":
    key = jax.random.PRNGKey(0)
    k1, k2, k3, k4, k5, k6, k7 = jax.random.split(key, 7)

    # case 1: small, aligned batch (single tile)
    B, C, D = 16, 8, 32
    logits = jax.random.normal(k1, (B, C), dtype=jnp.float32)
    labels = jax.random.randint(k2, (B,), 0, C, dtype=jnp.int32)
    features = jax.random.normal(k3, (B, D), dtype=jnp.float32)
    centers = jax.random.normal(k4, (C, D), dtype=jnp.float32)

    loss = jax.block_until_ready(
        ce_island_criterion(logits, labels, features, centers))
    ref = _reference(logits, labels, features, centers)
    assert jnp.allclose(loss, ref, rtol=1e-3, atol=1e-3), (loss, ref)

    # case 2: ragged batch (exercises batch padding + masking + multi-tile grid)
    B2 = 40
    logits2 = jax.random.normal(k5, (B2, C), dtype=jnp.float32)
    labels2 = jax.random.randint(k6, (B2,), 0, C, dtype=jnp.int32)
    features2 = jax.random.normal(k7, (B2, D), dtype=jnp.float32)

    loss2 = jax.block_until_ready(
        ce_island_criterion(logits2, labels2, features2, centers, tb=16))
    ref2 = _reference(logits2, labels2, features2, centers)
    assert jnp.allclose(loss2, ref2, rtol=1e-3, atol=1e-3), (loss2, ref2)

    print("KERNEL_OK")
</pallas_src>

<mosaic_0001>
module attributes {stable_mosaic.version = 11 : i64} {
  func.func @kernel(%arg0: i32, %arg1: memref<16x128xf32, #tpu.memory_space<vmem>>, %arg2: memref<16x1xi32, #tpu.memory_space<vmem>>, %arg3: memref<16x32xf32, #tpu.memory_space<vmem>>, %arg4: memref<128x32xf32, #tpu.memory_space<vmem>>, %arg5: memref<1x1x128xf32, #tpu.memory_space<vmem>>) attributes {dimension_semantics = [#tpu.dimension_semantics<parallel>], iteration_bounds = array<i64: 1>, scalar_prefetch = 0 : i64, scratch_operands = 0 : i64, tpu.core_type = #tpu.core_type<tc>, window_params = [{transform_indices = @transform_0, window_bounds = array<i64: 16, 128>}, {transform_indices = @transform_1, window_bounds = array<i64: 16, 1>}, {transform_indices = @transform_2, window_bounds = array<i64: 16, 32>}, {pipeline_mode = #tpu.pipeline_mode<synchronous>, transform_indices = @transform_3, window_bounds = array<i64: 128, 32>}, {transform_indices = @transform_4, window_bounds = array<i64: 1, 1, 128>}]} {
    %c0 = arith.constant 0 : index
    %c0_0 = arith.constant 0 : index
    %0 = vector.load %arg1[%c0, %c0_0] : memref<16x128xf32, #tpu.memory_space<vmem>>, vector<16x128xf32>
    %c0_1 = arith.constant 0 : index
    %c0_2 = arith.constant 0 : index
    %1 = vector.load %arg2[%c0_1, %c0_2] : memref<16x1xi32, #tpu.memory_space<vmem>>, vector<16x1xi32>
    %c0_3 = arith.constant 0 : index
    %c0_4 = arith.constant 0 : index
    %2 = vector.load %arg3[%c0_3, %c0_4] : memref<16x32xf32, #tpu.memory_space<vmem>>, vector<16x32xf32>
    %c0_5 = arith.constant 0 : index
    %c0_6 = arith.constant 0 : index
    %3 = vector.load %arg4[%c0_5, %c0_6] : memref<128x32xf32, #tpu.memory_space<vmem>>, vector<128x32xf32>
    %c16_i32 = arith.constant 16 : i32
    %4 = arith.muli %arg0, %c16_i32 : i32
    %5 = tpu.iota {dimensions = array<i32: 0>} : vector<16x1xi32>
    %6 = vector.broadcast %4 : i32 to vector<16x1xi32>
    %7 = arith.addi %6, %5 : vector<16x1xi32>
    %c16_i32_7 = arith.constant 16 : i32
    %8 = vector.broadcast %c16_i32_7 : i32 to vector<16x1xi32>
    %9 = arith.cmpi slt, %7, %8 : vector<16x1xi32>
    %10 = arith.extui %9 : vector<16x1xi1> to vector<16x1xi32>
    %11 = arith.sitofp %10 : vector<16x1xi32> to vector<16x1xf32>
    %12 = tpu.iota {dimensions = array<i32: 1>} : vector<16x128xi32>
    %13 = vector.broadcast %1 : vector<16x1xi32> to vector<16x128xi32>
    %14 = arith.cmpi eq, %13, %12 : vector<16x128xi32>
    %15 = arith.extui %14 : vector<16x128xi1> to vector<16x128xi32>
    %16 = arith.sitofp %15 : vector<16x128xi32> to vector<16x128xf32>
    %cst = arith.constant dense<0xFF800000> : vector<16xf32>
    %17 = vector.multi_reduction <maximumf>, %0, %cst [1] : vector<16x128xf32> to vector<16xf32>
    %18 = vector.shape_cast %17 : vector<16xf32> to vector<16x1xf32>
    %19 = vector.broadcast %18 : vector<16x1xf32> to vector<16x128xf32>
    %20 = arith.subf %0, %19 : vector<16x128xf32>
    %21 = math.exp %20 : vector<16x128xf32>
    %cst_8 = arith.constant dense<0.000000e+00> : vector<16xf32>
    %22 = vector.multi_reduction <add>, %21, %cst_8 [1] : vector<16x128xf32> to vector<16xf32>
    %23 = vector.shape_cast %22 : vector<16xf32> to vector<16x1xf32>
    %24 = arith.mulf %16, %0 : vector<16x128xf32>
    %cst_9 = arith.constant dense<0.000000e+00> : vector<16xf32>
    %25 = vector.multi_reduction <add>, %24, %cst_9 [1] : vector<16x128xf32> to vector<16xf32>
    %26 = vector.shape_cast %25 : vector<16xf32> to vector<16x1xf32>
    %27 = math.log %23 : vector<16x1xf32>
    %28 = arith.addf %18, %27 : vector<16x1xf32>
    %29 = arith.subf %28, %26 : vector<16x1xf32>
    %cst_10 = arith.constant dense<0.000000e+00> : vector<16x32xf32>
    %30 = tpu.matmul %16, %3, %cst_10 {dimension_numbers = #tpu.dot_dimension_numbers<[1], [0], [0], [1], [0, 0, 1, 1], [], []>, precision = #tpu.contract_precision<fp32>} : vector<16x128xf32>, vector<128x32xf32>, vector<16x32xf32> -> vector<16x32xf32>
    %31 = arith.subf %2, %30 : vector<16x32xf32>
    %32 = arith.mulf %31, %31 : vector<16x32xf32>
    %cst_11 = arith.constant dense<0.000000e+00> : vector<16xf32>
    %33 = vector.multi_reduction <add>, %32, %cst_11 [1] : vector<16x32xf32> to vector<16xf32>
    %34 = vector.shape_cast %33 : vector<16xf32> to vector<16x1xf32>
    %35 = arith.mulf %29, %11 : vector<16x1xf32>
    %36 = vector.shape_cast %35 : vector<16x1xf32> to vector<1x16x1xf32>
    %cst_12 = arith.constant dense<0.000000e+00> : vector<1xf32>
    %37 = vector.multi_reduction <add>, %36, %cst_12 [1, 2] : vector<1x16x1xf32> to vector<1xf32>
    %38 = vector.shape_cast %37 : vector<1xf32> to vector<1x1x1xf32>
    %39 = vector.extract %38[0, 0, 0] : f32 from vector<1x1x1xf32>
    %40 = vector.broadcast %39 : f32 to vector<1x1xf32>
    %41 = arith.mulf %34, %11 : vector<16x1xf32>
    %42 = vector.shape_cast %41 : vector<16x1xf32> to vector<1x16x1xf32>
    %cst_13 = arith.constant dense<0.000000e+00> : vector<1xf32>
    %43 = vector.multi_reduction <add>, %42, %cst_13 [1, 2] : vector<1x16x1xf32> to vector<1xf32>
    %44 = vector.shape_cast %43 : vector<1xf32> to vector<1x1x1xf32>
    %45 = vector.extract %44[0, 0, 0] : f32 from vector<1x1x1xf32>
    %46 = vector.broadcast %45 : f32 to vector<1x1xf32>
    %47 = tpu.iota {dimensions = array<i32: 1>} : vector<1x128xi32>
    %c0_i32 = arith.constant 0 : i32
    %48 = vector.broadcast %c0_i32 : i32 to vector<1x128xi32>
    %49 = arith.cmpi eq, %47, %48 : vector<1x128xi32>
    %cst_14 = arith.constant 0.000000e+00 : f32
    %50 = vector.shape_cast %40 : vector<1x1xf32> to vector<1x1xf32>
    %51 = vector.broadcast %50 : vector<1x1xf32> to vector<1x128xf32>
    %52 = vector.broadcast %cst_14 : f32 to vector<1x128xf32>
    %53 = arith.select %49, %51, %52 : vector<1x128xi1>, vector<1x128xf32>
    %c1_i32 = arith.constant 1 : i32
    %54 = vector.broadcast %c1_i32 : i32 to vector<1x128xi32>
    %55 = arith.cmpi eq, %47, %54 : vector<1x128xi32>
    %cst_15 = arith.constant 0.000000e+00 : f32
    %56 = vector.shape_cast %46 : vector<1x1xf32> to vector<1x1xf32>
    %57 = vector.broadcast %56 : vector<1x1xf32> to vector<1x128xf32>
    %58 = vector.broadcast %cst_15 : f32 to vector<1x128xf32>
    %59 = arith.select %55, %57, %58 : vector<1x128xi1>, vector<1x128xf32>
    %60 = arith.addf %53, %59 : vector<1x128xf32>
    %61 = vector.shape_cast %60 : vector<1x128xf32> to vector<1x1x128xf32>
    %c0_16 = arith.constant 0 : index
    %c0_17 = arith.constant 0 : index
    %c0_18 = arith.constant 0 : index
    %62 = vector.load %arg5[%c0_16, %c0_17, %c0_18] : memref<1x1x128xf32, #tpu.memory_space<vmem>>, vector<1x1x128xf32>
    tpu.vector_store %arg5[%c0_16, %c0_17, %c0_18], %61 {strides = array<i32>} : memref<1x1x128xf32, #tpu.memory_space<vmem>>, vector<1x1x128xf32>,
    return
  }
  func.func @transform_0(%arg0: i32) -> (i32, i32) {
    %c0_i32 = arith.constant 0 : i32
    %c0_i32_0 = arith.constant 0 : i32
    return %arg0, %c0_i32 : i32, i32
  }
  func.func @transform_1(%arg0: i32) -> (i32, i32) {
    %c0_i32 = arith.constant 0 : i32
    %c0_i32_0 = arith.constant 0 : i32
    return %arg0, %c0_i32 : i32, i32
  }
  func.func @transform_2(%arg0: i32) -> (i32, i32) {
    %c0_i32 = arith.constant 0 : i32
    %c0_i32_0 = arith.constant 0 : i32
    return %arg0, %c0_i32 : i32, i32
  }
  func.func @transform_3(%arg0: i32) -> (i32, i32) {
    %c0_i32 = arith.constant 0 : i32
    %c0_i32_0 = arith.constant 0 : i32
    %c0_i32_1 = arith.constant 0 : i32
    return %c0_i32, %c0_i32_0 : i32, i32
  }
  func.func @transform_4(%arg0: i32) -> (i32, i32, i32) {
    %c0_i32 = arith.constant 0 : i32
    %c0_i32_0 = arith.constant 0 : i32
    %c0_i32_1 = arith.constant 0 : i32
    return %arg0, %c0_i32, %c0_i32_0 : i32, i32, i32
  }
}

</mosaic_0001>

<llo_original>
// kernel: tpu_custom_call.1
$region0: #{tpu_custom_call.1}
  #allocation0 [shape = 'u32[]', space=smem, size = 0x4, offset = 0x4, fixed_abs, tag = 'smem constant byte address 0x4 - core index']
  #allocation1 [shape = 'u32[144,128]{1,0:T(1,128)}', space=vmem, size = 0x12000, scoped, tag = 'internal scratch']
  %s0 = inlined_call_operand.vmem [shape: f32[16,128], index: 0, kind: input, shape index: {}]
  %s1 = inlined_call_operand.vmem [shape: s32[16,1], index: 1, kind: input, shape index: {}]
  %s2 = inlined_call_operand.vmem [shape: f32[16,32], index: 2, kind: input, shape index: {}]
  %s3 = inlined_call_operand.vmem [shape: f32[128,32], index: 3, kind: input, shape index: {}]
  %s4 = inlined_call_operand.hbm [shape: f32[1,1,128], index: 4, kind: output, shape index: {}]
  %s5 = sld [smem:[#allocation0]]
  $region26: #{tpu_custom_call.1} parent=0
    _
  %s7 = ssub.s32 1, %s5
  %s8 = scalar_select 0, %s7, %s5
  $region1: #{tpu_custom_call.1} parent=0
    #allocation2 [shape = 'u8[512]{0}', space=vmem, size = 0x400, scoped, tag = 'output window, operand 0, single buffered']
    #allocation3 [shape = 's32[1]{0}', space=sflag, size = 0x4, scoped, tag = 'scoped memory for tpu_custom_call.1']
    %9 = vsyncpa [#allocation3], 0
    // Predicated region
    $region2: #{tpu_custom_call.1} parent=1 // pred_check
      _
    $region3: #{tpu_custom_call.1} parent=1 // pred_check_branch
      %11 = sbr.rel (0) target = $region5
    $region4: #{tpu_custom_call.1} parent=1 // pred_region
      _
    $region5: #{tpu_custom_call.1} parent=1 // pred_fallthru
      _
    // Predicated region
    $region6: #{tpu_custom_call.1} parent=1 // pred_check
      _
    $region7: #{tpu_custom_call.1} parent=1 // pred_check_branch
      %13 = sbr.rel (0) target = $region9
    $region8: #{tpu_custom_call.1} parent=1 // pred_region
      _
    $region9: #{tpu_custom_call.1} parent=1 // pred_fallthru
      _
    // Predicated region
    $region10: #{tpu_custom_call.1} parent=1 // pred_check
      _
    $region11: #{tpu_custom_call.1} parent=1 // pred_check_branch
      %15 = sbr.rel (0) target = $region13
    $region12: #{tpu_custom_call.1} parent=1 // pred_region
      _
    $region13: #{tpu_custom_call.1} parent=1 // pred_fallthru
      _
    // Predicated region
    $region14: #{tpu_custom_call.1} parent=1 // pred_check
      _
    $region15: #{tpu_custom_call.1} parent=1 // pred_check_branch
      %17 = sbr.rel (0) target = $region17
    $region16: #{tpu_custom_call.1} parent=1 // pred_region
      _
    $region17: #{tpu_custom_call.1} parent=1 // pred_fallthru
      _
    %v18 = vld [vmem:[%s0] sm:$0xff]
    %v19 = vld [vmem:[%s0 + $0x8] sm:$0xff]
    %v20 = vld [vmem:[%s1] sm:$0xff]
    %v21 = vld [vmem:[%s1 + $0x8] sm:$0xff]
    %v22 = vld [vmem:[%s2] sm:$0xff]
    %v23 = vld [vmem:[%s2 + $0x8] sm:$0xff]
    %v24 = vld [vmem:[%s3] sm:$0xff]
    %v25 = vld [vmem:[%s3 + $0x8] sm:$0xff]
    %v26 = vld [vmem:[%s3 + $0x10] sm:$0xff]
    %v27 = vld [vmem:[%s3 + $0x18] sm:$0xff]
    %v28 = vld [vmem:[%s3 + $0x20] sm:$0xff]
    %v29 = vld [vmem:[%s3 + $0x28] sm:$0xff]
    %v30 = vld [vmem:[%s3 + $0x30] sm:$0xff]
    %v31 = vld [vmem:[%s3 + $0x38] sm:$0xff]
    %v32 = vld [vmem:[%s3 + $0x40] sm:$0xff]
    %v33 = vld [vmem:[%s3 + $0x48] sm:$0xff]
    %v34 = vld [vmem:[%s3 + $0x50] sm:$0xff]
    %v35 = vld [vmem:[%s3 + $0x58] sm:$0xff]
    %v36 = vld [vmem:[%s3 + $0x60] sm:$0xff]
    %v37 = vld [vmem:[%s3 + $0x68] sm:$0xff]
    %v38 = vld [vmem:[%s3 + $0x70] sm:$0xff]
    %v39 = vld [vmem:[%s3 + $0x78] sm:$0xff]
    %s40 = smul.u32 0, 16
    %v41 = vlaneseq
    %v42 = vshrl.u32 %v41, 7
    %v43 = vadd.s32 %v42, 8
    %v44 = vstv %s40
    %v45 = vadd.s32 %v44, %v42
    %v46 = vadd.s32 %v44, %v43
    %vm47 = vcmp.lt.s32.totalorder %v45, 16
    %vm48 = vcmp.lt.s32.totalorder %v46, 16
    %v49 = vsel %vm47, 1, 0
    %v50 = vsel %vm48, 1, 0
    %v51 = vcvt.s32.f32 %v49
    %v52 = vcvt.s32.f32 %v50
    %v53 = vlaneseq
    %v54 = vand.u32 %v53, 127
    %55 = vset.pattern.permute.xlu0 0
    %56 = vperm.xlu0 %55, %v20
    %v57 = vpop.permute.xlu0 %56
    %58 = vset.pattern.permute.xlu0 0
    %59 = vperm.xlu0 %58, %v21
    %v60 = vpop.permute.xlu0 %59
    %vm61 = vcmp.eq.s32.totalorder %v57, %v54
    %vm62 = vcmp.eq.s32.totalorder %v60, %v54
    %v63 = vsel %vm61, 1, 0
    %v64 = vsel %vm62, 1, 0
    %v65 = vcvt.s32.f32 %v63
    %v66 = vcvt.s32.f32 %v64
    %67 = vmax.xlane.f32.xlu0 %v18
    %v68 = vpop.xlane.xlu0 %67
    %69 = vmax.xlane.f32.xlu0 %v19
    %v70 = vpop.xlane.xlu0 %69
    %v71 = vsub.f32 %v18, %v68
    %v72 = vsub.f32 %v19, %v70
    %v73 = vmul.f32 %v71, 1.442695
    %v74 = vpow.pop %v73
    %v75 = vmul.f32 %v72, 1.442695
    %v76 = vpow.pop %v75
    %77 = vadd.xlane.f32.xlu0 %v74
    %v78 = vpop.xlane.xlu0 %77
    %79 = vadd.xlane.f32.xlu0 %v76
    %v80 = vpop.xlane.xlu0 %79
    %v81 = vmul.f32 %v65, %v18
    %v82 = vmul.f32 %v66, %v19
    %83 = vadd.xlane.f32.xlu0 %v81
    %v84 = vpop.xlane.xlu0 %83
    %85 = vadd.xlane.f32.xlu0 %v82
    %v86 = vpop.xlane.xlu0 %85
    %v87 = vlog2.pop %v78
    %v88 = vmul.f32 %v87, 0.6931472
    %v89 = vlog2.pop %v80
    %v90 = vmul.f32 %v89, 0.6931472
    %v91 = vadd.f32 %v68, %v88
    %v92 = vadd.f32 %v70, %v90
    %v93 = vsub.f32 %v91, %v84
    %v94 = vsub.f32 %v92, %v86
    %95 = vmatprep.subr.mxu0 0.0
    %v96 = vand.u32 %v24, 4294901760
    %97 = vmatpush1.msra.mxu0 %v96
    %98 = vmatprep.subr.mxu0 0.0
    %v99 = vand.u32 %v25, 4294901760
    %100 = vmatpush1.msra.mxu0 %v99
    %101 = vmatprep.subr.mxu0 0.0
    %v102 = vand.u32 %v26, 4294901760
    %103 = vmatpush1.msra.mxu0 %v102
    %104 = vmatprep.subr.mxu0 0.0
    %v105 = vand.u32 %v27, 4294901760
    %106 = vmatpush1.msra.mxu0 %v105
    %107 = vmatprep.subr.mxu0 0.0
    %v108 = vand.u32 %v28, 4294901760
    %109 = vmatpush1.msra.mxu0 %v108
    %110 = vmatprep.subr.mxu0 0.0
    %v111 = vand.u32 %v29, 4294901760
    %112 = vmatpush1.msra.mxu0 %v111
    %113 = vmatprep.subr.mxu0 0.0
    %v114 = vand.u32 %v30, 4294901760
    %115 = vmatpush1.msra.mxu0 %v114
    %116 = vmatprep.subr.mxu0 0.0
    %v117 = vand.u32 %v31, 4294901760
    %118 = vmatpush1.msra.mxu0 %v117
    %119 = vmatprep.subr.mxu0 0.0
    %v120 = vand.u32 %v32, 4294901760
    %121 = vmatpush1.msra.mxu0 %v120
    %122 = vmatprep.subr.mxu0 0.0
    %v123 = vand.u32 %v33, 4294901760
    %124 = vmatpush1.msra.mxu0 %v123
    %125 = vmatprep.subr.mxu0 0.0
    %v126 = vand.u32 %v34, 4294901760
    %127 = vmatpush1.msra.mxu0 %v126
    %128 = vmatprep.subr.mxu0 0.0
    %v129 = vand.u32 %v35, 4294901760
    %130 = vmatpush1.msra.mxu0 %v129
    %131 = vmatprep.subr.mxu0 0.0
    %v132 = vand.u32 %v36, 4294901760
    %133 = vmatpush1.msra.mxu0 %v132
    %134 = vmatprep.subr.mxu0 0.0
    %v135 = vand.u32 %v37, 4294901760
    %136 = vmatpush1.msra.mxu0 %v135
    %137 = vmatprep.subr.mxu0 0.0
    %v138 = vand.u32 %v38, 4294901760
    %139 = vmatpush1.msra.mxu0 %v138
    %140 = vmatprep.subr.mxu0 0.0
    %v141 = vand.u32 %v39, 4294901760
    %142 = vmatpush1.msra.mxu0 %v141
    %143 = vmatprep.subr.mxu0 0.0
    %144 = vmatpush1.msra.mxu0 0.0
    %145 = vmatprep.subr.mxu0 0.0
    %146 = vmatpush1.msra.mxu0 0.0
    %147 = vmatprep.subr.mxu0 0.0
    %148 = vmatpush1.msra.mxu0 0.0
    %149 = vmatprep.subr.mxu0 0.0
    %150 = vmatpush1.msra.mxu0 0.0
    %151 = vmatprep.subr.mxu0 0.0
    %152 = vmatpush1.msra.mxu0 0.0
    %153 = vmatprep.subr.mxu0 0.0
    %154 = vmatpush1.msra.mxu0 0.0
    %155 = vmatprep.subr.mxu0 0.0
    %156 = vmatpush1.msra.mxu0 0.0
    %157 = vmatprep.subr.mxu0 0.0
    %158 = vmatpush1.msra.mxu0 0.0
    %159 = vmatprep.subr.mxu0 0.0
    %160 = vmatpush1.msra.mxu0 0.0
    %161 = vmatprep.subr.mxu0 0.0
    %162 = vmatpush1.msra.mxu0 0.0
    %163 = vmatprep.subr.mxu0 0.0
    %164 = vmatpush1.msra.mxu0 0.0
    %165 = vmatprep.subr.mxu0 0.0
    %166 = vmatpush1.msra.mxu0 0.0
    %167 = vmatprep.subr.mxu0 0.0
    %168 = vmatpush1.msra.mxu0 0.0
    %169 = vmatprep.subr.mxu0 0.0
    %170 = vmatpush1.msra.mxu0 0.0
    %171 = vmatprep.subr.mxu0 0.0
    %172 = vmatpush1.msra.mxu0 0.0
    %173 = vmatprep.subr.mxu0 0.0
    %174 = vmatpush1.msra.mxu0 0.0
    %175 = vmatprep.mubr.f32.mxu0 0.0
    %v176 = vand.u32 %v65, 4294901760
    %v177 = vsub.f32 %v65, %v176
    %v178 = vand.u32 %v177, 4294901760
    %v179 = vsub.f32 %v177, %v178
    %v180 = vand.u32 %v179, 4294901760
    %181 = vmatmul.mubr.f32.gmra.mrb[0].mxu0 %v180
    %v182 = vpop.f32.mrb[0].mxu0
    %v183 = vadd.f32 0.0, %v182
    %v184 = vpop.f32.mrb[0].mxu0
    %185 = vmatprep.mubr.f32.mxu0 0.0
    %v186 = vand.u32 %v66, 4294901760
    %v187 = vsub.f32 %v66, %v186
    %v188 = vand.u32 %v187, 4294901760
    %v189 = vsub.f32 %v187, %v188
    %v190 = vand.u32 %v189, 4294901760
    %191 = vmatmul.mubr.f32.gmra.mrb[0].mxu0 %v190
    %v192 = vpop.f32.mrb[0].mxu0
    %v193 = vadd.f32 0.0, %v192
    %v194 = vpop.f32.mrb[0].mxu0
    %195 = vdwg.mxu0
    %196 = vmatprep.subr.mxu0 0.0
    %v197 = vand.u32 %v24, 4294901760
    %v198 = vsub.f32 %v24, %v197
    %v199 = vand.u32 %v198, 4294901760
    %v200 = vsub.f32 %v198, %v199
    %v201 = vand.u32 %v200, 4294901760
    %202 = vmatpush1.msra.mxu0 %v201
    %203 = vmatprep.subr.mxu0 0.0
    %v204 = vand.u32 %v25, 4294901760
    %v205 = vsub.f32 %v25, %v204
    %v206 = vand.u32 %v205, 4294901760
    %v207 = vsub.f32 %v205, %v206
    %v208 = vand.u32 %v207, 4294901760
    %209 = vmatpush1.msra.mxu0 %v208
    %210 = vmatprep.subr.mxu0 0.0
    %v211 = vand.u32 %v26, 4294901760
    %v212 = vsub.f32 %v26, %v211
    %v213 = vand.u32 %v212, 4294901760
    %v214 = vsub.f32 %v212, %v213
    %v215 = vand.u32 %v214, 4294901760
    %216 = vmatpush1.msra.mxu0 %v215
    %217 = vmatprep.subr.mxu0 0.0
    %v218 = vand.u32 %v27, 4294901760
    %v219 = vsub.f32 %v27, %v218
    %v220 = vand.u32 %v219, 4294901760
    %v221 = vsub.f32 %v219, %v220
    %v222 = vand.u32 %v221, 4294901760
    %223 = vmatpush1.msra.mxu0 %v222
    %224 = vmatprep.subr.mxu0 0.0
    %v225 = vand.u32 %v28, 4294901760
    %v226 = vsub.f32 %v28, %v225
    %v227 = vand.u32 %v226, 4294901760
    %v228 = vsub.f32 %v226, %v227
    %v229 = vand.u32 %v228, 4294901760
    %230 = vmatpush1.msra.mxu0 %v229
    %231 = vmatprep.subr.mxu0 0.0
    %v232 = vand.u32 %v29, 4294901760
    %v233 = vsub.f32 %v29, %v232
    %v234 = vand.u32 %v233, 4294901760
    %v235 = vsub.f32 %v233, %v234
    %v236 = vand.u32 %v235, 4294901760
    %237 = vmatpush1.msra.mxu0 %v236
    %238 = vmatprep.subr.mxu0 0.0
    %v239 = vand.u32 %v30, 4294901760
    %v240 = vsub.f32 %v30, %v239
    %v241 = vand.u32 %v240, 4294901760
    %v242 = vsub.f32 %v240, %v241
    %v243 = vand.u32 %v242, 4294901760
    %244 = vmatpush1.msra.mxu0 %v243
    %245 = vmatprep.subr.mxu0 0.0
    %v246 = vand.u32 %v31, 4294901760
    %v247 = vsub.f32 %v31, %v246
    %v248 = vand.u32 %v247, 4294901760
    %v249 = vsub.f32 %v247, %v248
    %v250 = vand.u32 %v249, 4294901760
    %251 = vmatpush1.msra.mxu0 %v250
    %252 = vmatprep.subr.mxu0 0.0
    %v253 = vand.u32 %v32, 4294901760
    %v254 = vsub.f32 %v32, %v253
    %v255 = vand.u32 %v254, 4294901760
    %v256 = vsub.f32 %v254, %v255
    %v257 = vand.u32 %v256, 4294901760
    %258 = vmatpush1.msra.mxu0 %v257
    %259 = vmatprep.subr.mxu0 0.0
    %v260 = vand.u32 %v33, 4294901760
    %v261 = vsub.f32 %v33, %v260
    %v262 = vand.u32 %v261, 4294901760
    %v263 = vsub.f32 %v261, %v262
    %v264 = vand.u32 %v263, 4294901760
    %265 = vmatpush1.msra.mxu0 %v264
    %266 = vmatprep.subr.mxu0 0.0
    %v267 = vand.u32 %v34, 4294901760
    %v268 = vsub.f32 %v34, %v267
    %v269 = vand.u32 %v268, 4294901760
    %v270 = vsub.f32 %v268, %v269
    %v271 = vand.u32 %v270, 4294901760
    %272 = vmatpush1.msra.mxu0 %v271
    %273 = vmatprep.subr.mxu0 0.0
    %v274 = vand.u32 %v35, 4294901760
    %v275 = vsub.f32 %v35, %v274
    %v276 = vand.u32 %v275, 4294901760
    %v277 = vsub.f32 %v275, %v276
    %v278 = vand.u32 %v277, 4294901760
    %279 = vmatpush1.msra.mxu0 %v278
    %280 = vmatprep.subr.mxu0 0.0
    %v281 = vand.u32 %v36, 4294901760
    %v282 = vsub.f32 %v36, %v281
    %v283 = vand.u32 %v282, 4294901760
    %v284 = vsub.f32 %v282, %v283
    %v285 = vand.u32 %v284, 4294901760
    %286 = vmatpush1.msra.mxu0 %v285
    %287 = vmatprep.subr.mxu0 0.0
    %v288 = vand.u32 %v37, 4294901760
    %v289 = vsub.f32 %v37, %v288
    %v290 = vand.u32 %v289, 4294901760
    %v291 = vsub.f32 %v289, %v290
    %v292 = vand.u32 %v291, 4294901760
    %293 = vmatpush1.msra.mxu0 %v292
    %294 = vmatprep.subr.mxu0 0.0
    %v295 = vand.u32 %v38, 4294901760
    %v296 = vsub.f32 %v38, %v295
    %v297 = vand.u32 %v296, 4294901760
    %v298 = vsub.f32 %v296, %v297
    %v299 = vand.u32 %v298, 4294901760
    %300 = vmatpush1.msra.mxu0 %v299
    %301 = vmatprep.subr.mxu0 0.0
    %v302 = vand.u32 %v39, 4294901760
    %v303 = vsub.f32 %v39, %v302
    %v304 = vand.u32 %v303, 4294901760
    %v305 = vsub.f32 %v303, %v304
    %v306 = vand.u32 %v305, 4294901760
    %307 = vmatpush1.msra.mxu0 %v306
    %308 = vmatprep.subr.mxu0 0.0
    %309 = vmatpush1.msra.mxu0 0.0
    %310 = vmatprep.subr.mxu0 0.0
    %311 = vmatpush1.msra.mxu0 0.0
    %312 = vmatprep.subr.mxu0 0.0
    %313 = vmatpush1.msra.mxu0 0.0
    %314 = vmatprep.subr.mxu0 0.0
    %315 = vmatpush1.msra.mxu0 0.0
    %316 = vmatprep.subr.mxu0 0.0
    %317 = vmatpush1.msra.mxu0 0.0
    %318 = vmatprep.subr.mxu0 0.0
    %319 = vmatpush1.msra.mxu0 0.0
    %320 = vmatprep.subr.mxu0 0.0
    %321 = vmatpush1.msra.mxu0 0.0
    %322 = vmatprep.subr.mxu0 0.0
    %323 = vmatpush1.msra.mxu0 0.0
    %324 = vmatprep.subr.mxu0 0.0
    %325 = vmatpush1.msra.mxu0 0.0
    %326 = vmatprep.subr.mxu0 0.0
    %327 = vmatpush1.msra.mxu0 0.0
    %328 = vmatprep.subr.mxu0 0.0
    %329 = vmatpush1.msra.mxu0 0.0
    %330 = vmatprep.subr.mxu0 0.0
    %331 = vmatpush1.msra.mxu0 0.0
    %332 = vmatprep.subr.mxu0 0.0
    %333 = vmatpush1.msra.mxu0 0.0
    %334 = vmatprep.subr.mxu0 0.0
    %335 = vmatpush1.msra.mxu0 0.0
    %336 = vmatprep.subr.mxu0 0.0
    %337 = vmatpush1.msra.mxu0 0.0
    %338 = vmatprep.subr.mxu0 0.0
    %339 = vmatpush1.msra.mxu0 0.0
    %340 = vmatprep.mubr.f32.mxu0 0.0
    %v341 = vand.u32 %v65, 4294901760
    %342 = vmatmul.mubr.f32.gmra.mrb[0].mxu0 %v341
    %v343 = vpop.f32.mrb[0].mxu0
    %v344 = vadd.f32 %v183, %v343
    %v345 = vpop.f32.mrb[0].mxu0
    %346 = vmatprep.mubr.f32.mxu0 0.0
    %v347 = vand.u32 %v66, 4294901760
    %348 = vmatmul.mubr.f32.gmra.mrb[0].mxu0 %v347
    %v349 = vpop.f32.mrb[0].mxu0
    %v350 = vadd.f32 %v193, %v349
    %v351 = vpop.f32.mrb[0].mxu0
    %352 = vdwg.mxu0
    %353 = vmatprep.subr.mxu0 0.0
    %v354 = vand.u32 %v24, 4294901760
    %v355 = vsub.f32 %v24, %v354
    %356 = vmatpush1.msra.mxu0 %v355
    %357 = vmatprep.subr.mxu0 0.0
    %v358 = vand.u32 %v25, 4294901760
    %v359 = vsub.f32 %v25, %v358
    %360 = vmatpush1.msra.mxu0 %v359
    %361 = vmatprep.subr.mxu0 0.0
    %v362 = vand.u32 %v26, 4294901760
    %v363 = vsub.f32 %v26, %v362
    %364 = vmatpush1.msra.mxu0 %v363
    %365 = vmatprep.subr.mxu0 0.0
    %v366 = vand.u32 %v27, 4294901760
    %v367 = vsub.f32 %v27, %v366
    %368 = vmatpush1.msra.mxu0 %v367
    %369 = vmatprep.subr.mxu0 0.0
    %v370 = vand.u32 %v28, 4294901760
    %v371 = vsub.f32 %v28, %v370
    %372 = vmatpush1.msra.mxu0 %v371
    %373 = vmatprep.subr.mxu0 0.0
    %v374 = vand.u32 %v29, 4294901760
    %v375 = vsub.f32 %v29, %v374
    %376 = vmatpush1.msra.mxu0 %v375
    %377 = vmatprep.subr.mxu0 0.0
    %v378 = vand.u32 %v30, 4294901760
    %v379 = vsub.f32 %v30, %v378
    %380 = vmatpush1.msra.mxu0 %v379
    %381 = vmatprep.subr.mxu0 0.0
    %v382 = vand.u32 %v31, 4294901760
    %v383 = vsub.f32 %v31, %v382
    %384 = vmatpush1.msra.mxu0 %v383
    %385 = vmatprep.subr.mxu0 0.0
    %v386 = vand.u32 %v32, 4294901760
    %v387 = vsub.f32 %v32, %v386
    %388 = vmatpush1.msra.mxu0 %v387
    %389 = vmatprep.subr.mxu0 0.0
    %v390 = vand.u32 %v33, 4294901760
    %v391 = vsub.f32 %v33, %v390
    %392 = vmatpush1.msra.mxu0 %v391
    %393 = vmatprep.subr.mxu0 0.0
    %v394 = vand.u32 %v34, 4294901760
    %v395 = vsub.f32 %v34, %v394
    %396 = vmatpush1.msra.mxu0 %v395
    %397 = vmatprep.subr.mxu0 0.0
    %v398 = vand.u32 %v35, 4294901760
    %v399 = vsub.f32 %v35, %v398
    %400 = vmatpush1.msra.mxu0 %v399
    %401 = vmatprep.subr.mxu0 0.0
    %v402 = vand.u32 %v36, 4294901760
    %v403 = vsub.f32 %v36, %v402
    %404 = vmatpush1.msra.mxu0 %v403
    %405 = vmatprep.subr.mxu0 0.0
    %v406 = vand.u32 %v37, 4294901760
    %v407 = vsub.f32 %v37, %v406
    %408 = vmatpush1.msra.mxu0 %v407
    %409 = vmatprep.subr.mxu0 0.0
    %v410 = vand.u32 %v38, 4294901760
    %v411 = vsub.f32 %v38, %v410
    %412 = vmatpush1.msra.mxu0 %v411
    %413 = vmatprep.subr.mxu0 0.0
    %v414 = vand.u32 %v39, 4294901760
    %v415 = vsub.f32 %v39, %v414
    %416 = vmatpush1.msra.mxu0 %v415
    %417 = vmatprep.subr.mxu0 0.0
    %418 = vmatpush1.msra.mxu0 0.0
    %419 = vmatprep.subr.mxu0 0.0
    %420 = vmatpush1.msra.mxu0 0.0
    %421 = vmatprep.subr.mxu0 0.0
    %422 = vmatpush1.msra.mxu0 0.0
    %423 = vmatprep.subr.mxu0 0.0
    %424 = vmatpush1.msra.mxu0 0.0
    %425 = vmatprep.subr.mxu0 0.0
    %426 = vmatpush1.msra.mxu0 0.0
    %427 = vmatprep.subr.mxu0 0.0
    %428 = vmatpush1.msra.mxu0 0.0
    %429 = vmatprep.subr.mxu0 0.0
    %430 = vmatpush1.msra.mxu0 0.0
    %431 = vmatprep.subr.mxu0 0.0
    %432 = vmatpush1.msra.mxu0 0.0
    %433 = vmatprep.subr.mxu0 0.0
    %434 = vmatpush1.msra.mxu0 0.0
    %435 = vmatprep.subr.mxu0 0.0
    %436 = vmatpush1.msra.mxu0 0.0
    %437 = vmatprep.subr.mxu0 0.0
    %438 = vmatpush1.msra.mxu0 0.0
    %439 = vmatprep.subr.mxu0 0.0
    %440 = vmatpush1.msra.mxu0 0.0
    %441 = vmatprep.subr.mxu0 0.0
    %442 = vmatpush1.msra.mxu0 0.0
    %443 = vmatprep.subr.mxu0 0.0
    %444 = vmatpush1.msra.mxu0 0.0
    %445 = vmatprep.subr.mxu0 0.0
    %446 = vmatpush1.msra.mxu0 0.0
    %447 = vmatprep.subr.mxu0 0.0
    %448 = vmatpush1.msra.mxu0 0.0
    %449 = vmatprep.mubr.f32.mxu0 0.0
    %v450 = vand.u32 %v65, 4294901760
    %v451 = vsub.f32 %v65, %v450
    %452 = vmatmul.mubr.f32.gmra.mrb[0].mxu0 %v451
    %v453 = vpop.f32.mrb[0].mxu0
    %v454 = vadd.f32 %v344, %v453
    %v455 = vpop.f32.mrb[0].mxu0
    %456 = vmatprep.mubr.f32.mxu0 0.0
    %v457 = vand.u32 %v66, 4294901760
    %v458 = vsub.f32 %v66, %v457
    %459 = vmatmul.mubr.f32.gmra.mrb[0].mxu0 %v458
    %v460 = vpop.f32.mrb[0].mxu0
    %v461 = vadd.f32 %v350, %v460
    %v462 = vpop.f32.mrb[0].mxu0
    %463 = vdwg.mxu0
    %464 = vmatprep.subr.mxu0 0.0
    %v465 = vand.u32 %v24, 4294901760
    %466 = vmatpush1.msra.mxu0 %v465
    %467 = vmatprep.subr.mxu0 0.0
    %v468 = vand.u32 %v25, 4294901760
    %469 = vmatpush1.msra.mxu0 %v468
    %470 = vmatprep.subr.mxu0 0.0
    %v471 = vand.u32 %v26, 4294901760
    %472 = vmatpush1.msra.mxu0 %v471
    %473 = vmatprep.subr.mxu0 0.0
    %v474 = vand.u32 %v27, 4294901760
    %475 = vmatpush1.msra.mxu0 %v474
    %476 = vmatprep.subr.mxu0 0.0
    %v477 = vand.u32 %v28, 4294901760
    %478 = vmatpush1.msra.mxu0 %v477
    %479 = vmatprep.subr.mxu0 0.0
    %v480 = vand.u32 %v29, 4294901760
    %481 = vmatpush1.msra.mxu0 %v480
    %482 = vmatprep.subr.mxu0 0.0
    %v483 = vand.u32 %v30, 4294901760
    %484 = vmatpush1.msra.mxu0 %v483
    %485 = vmatprep.subr.mxu0 0.0
    %v486 = vand.u32 %v31, 4294901760
    %487 = vmatpush1.msra.mxu0 %v486
    %488 = vmatprep.subr.mxu0 0.0
    %v489 = vand.u32 %v32, 4294901760
    %490 = vmatpush1.msra.mxu0 %v489
    %491 = vmatprep.subr.mxu0 0.0
    %v492 = vand.u32 %v33, 4294901760
    %493 = vmatpush1.msra.mxu0 %v492
    %494 = vmatprep.subr.mxu0 0.0
    %v495 = vand.u32 %v34, 4294901760
    %496 = vmatpush1.msra.mxu0 %v495
    %497 = vmatprep.subr.mxu0 0.0
    %v498 = vand.u32 %v35, 4294901760
    %499 = vmatpush1.msra.mxu0 %v498
    %500 = vmatprep.subr.mxu0 0.0
    %v501 = vand.u32 %v36, 4294901760
    %502 = vmatpush1.msra.mxu0 %v501
    %503 = vmatprep.subr.mxu0 0.0
    %v504 = vand.u32 %v37, 4294901760
    %505 = vmatpush1.msra.mxu0 %v504
    %506 = vmatprep.subr.mxu0 0.0
    %v507 = vand.u32 %v38, 4294901760
    %508 = vmatpush1.msra.mxu0 %v507
    %509 = vmatprep.subr.mxu0 0.0
    %v510 = vand.u32 %v39, 4294901760
    %511 = vmatpush1.msra.mxu0 %v510
    %512 = vmatprep.subr.mxu0 0.0
    %513 = vmatpush1.msra.mxu0 0.0
    %514 = vmatprep.subr.mxu0 0.0
    %515 = vmatpush1.msra.mxu0 0.0
    %516 = vmatprep.subr.mxu0 0.0
    %517 = vmatpush1.msra.mxu0 0.0
    %518 = vmatprep.subr.mxu0 0.0
    %519 = vmatpush1.msra.mxu0 0.0
    %520 = vmatprep.subr.mxu0 0.0
    %521 = vmatpush1.msra.mxu0 0.0
    %522 = vmatprep.subr.mxu0 0.0
    %523 = vmatpush1.msra.mxu0 0.0
    %524 = vmatprep.subr.mxu0 0.0
    %525 = vmatpush1.msra.mxu0 0.0
    %526 = vmatprep.subr.mxu0 0.0
    %527 = vmatpush1.msra.mxu0 0.0
    %528 = vmatprep.subr.mxu0 0.0
    %529 = vmatpush1.msra.mxu0 0.0
    %530 = vmatprep.subr.mxu0 0.0
    %531 = vmatpush1.msra.mxu0 0.0
    %532 = vmatprep.subr.mxu0 0.0
    %533 = vmatpush1.msra.mxu0 0.0
    %534 = vmatprep.subr.mxu0 0.0
    %535 = vmatpush1.msra.mxu0 0.0
    %536 = vmatprep.subr.mxu0 0.0
    %537 = vmatpush1.msra.mxu0 0.0
    %538 = vmatprep.subr.mxu0 0.0
    %539 = vmatpush1.msra.mxu0 0.0
    %540 = vmatprep.subr.mxu0 0.0
    %541 = vmatpush1.msra.mxu0 0.0
    %542 = vmatprep.subr.mxu0 0.0
    %543 = vmatpush1.msra.mxu0 0.0
    %544 = vmatprep.mubr.f32.mxu0 0.0
    %v545 = vand.u32 %v65, 4294901760
    %v546 = vsub.f32 %v65, %v545
    %v547 = vand.u32 %v546, 4294901760
    %548 = vmatmul.mubr.f32.gmra.mrb[0].mxu0 %v547
    %v549 = vpop.f32.mrb[0].mxu0
    %v550 = vadd.f32 %v454, %v549
    %v551 = vpop.f32.mrb[0].mxu0
    %552 = vmatprep.mubr.f32.mxu0 0.0
    %v553 = vand.u32 %v66, 4294901760
    %v554 = vsub.f32 %v66, %v553
    %v555 = vand.u32 %v554, 4294901760
    %556 = vmatmul.mubr.f32.gmra.mrb[0].mxu0 %v555
    %v557 = vpop.f32.mrb[0].mxu0
    %v558 = vadd.f32 %v461, %v557
    %v559 = vpop.f32.mrb[0].mxu0
    %560 = vdwg.mxu0
    %561 = vmatprep.subr.mxu0 0.0
    %v562 = vand.u32 %v24, 4294901760
    %v563 = vsub.f32 %v24, %v562
    %v564 = vand.u32 %v563, 4294901760
    %565 = vmatpush1.msra.mxu0 %v564
    %566 = vmatprep.subr.mxu0 0.0
    %v567 = vand.u32 %v25, 4294901760
    %v568 = vsub.f32 %v25, %v567
    %v569 = vand.u32 %v568, 4294901760
    %570 = vmatpush1.msra.mxu0 %v569
    %571 = vmatprep.subr.mxu0 0.0
    %v572 = vand.u32 %v26, 4294901760
    %v573 = vsub.f32 %v26, %v572
    %v574 = vand.u32 %v573, 4294901760
    %575 = vmatpush1.msra.mxu0 %v574
    %576 = vmatprep.subr.mxu0 0.0
    %v577 = vand.u32 %v27, 4294901760
    %v578 = vsub.f32 %v27, %v577
    %v579 = vand.u32 %v578, 4294901760
    %580 = vmatpush1.msra.mxu0 %v579
    %581 = vmatprep.subr.mxu0 0.0
    %v582 = vand.u32 %v28, 4294901760
    %v583 = vsub.f32 %v28, %v582
    %v584 = vand.u32 %v583, 4294901760
    %585 = vmatpush1.msra.mxu0 %v584
    %586 = vmatprep.subr.mxu0 0.0
    %v587 = vand.u32 %v29, 4294901760
    %v588 = vsub.f32 %v29, %v587
    %v589 = vand.u32 %v588, 4294901760
    %590 = vmatpush1.msra.mxu0 %v589
    %591 = vmatprep.subr.mxu0 0.0
    %v592 = vand.u32 %v30, 4294901760
    %v593 = vsub.f32 %v30, %v592
    %v594 = vand.u32 %v593, 4294901760
    %595 = vmatpush1.msra.mxu0 %v594
    %596 = vmatprep.subr.mxu0 0.0
    %v597 = vand.u32 %v31, 4294901760
    %v598 = vsub.f32 %v31, %v597
    %v599 = vand.u32 %v598, 4294901760
    %600 = vmatpush1.msra.mxu0 %v599
    %601 = vmatprep.subr.mxu0 0.0
    %v602 = vand.u32 %v32, 4294901760
    %v603 = vsub.f32 %v32, %v602
    %v604 = vand.u32 %v603, 4294901760
    %605 = vmatpush1.msra.mxu0 %v604
    %606 = vmatprep.subr.mxu0 0.0
    %v607 = vand.u32 %v33, 4294901760
    %v608 = vsub.f32 %v33, %v607
    %v609 = vand.u32 %v608, 4294901760
    %610 = vmatpush1.msra.mxu0 %v609
    %611 = vmatprep.subr.mxu0 0.0
    %v612 = vand.u32 %v34, 4294901760
    %v613 = vsub.f32 %v34, %v612
    %v614 = vand.u32 %v613, 4294901760
    %615 = vmatpush1.msra.mxu0 %v614
    %616 = vmatprep.subr.mxu0 0.0
    %v617 = vand.u32 %v35, 4294901760
    %v618 = vsub.f32 %v35, %v617
    %v619 = vand.u32 %v618, 4294901760
    %620 = vmatpush1.msra.mxu0 %v619
    %621 = vmatprep.subr.mxu0 0.0
    %v622 = vand.u32 %v36, 4294901760
    %v623 = vsub.f32 %v36, %v622
    %v624 = vand.u32 %v623, 4294901760
    %625 = vmatpush1.msra.mxu0 %v624
    %626 = vmatprep.subr.mxu0 0.0
    %v627 = vand.u32 %v37, 4294901760
    %v628 = vsub.f32 %v37, %v627
    %v629 = vand.u32 %v628, 4294901760
    %630 = vmatpush1.msra.mxu0 %v629
    %631 = vmatprep.subr.mxu0 0.0
    %v632 = vand.u32 %v38, 4294901760
    %v633 = vsub.f32 %v38, %v632
    %v634 = vand.u32 %v633, 4294901760
    %635 = vmatpush1.msra.mxu0 %v634
    %636 = vmatprep.subr.mxu0 0.0
    %v637 = vand.u32 %v39, 4294901760
    %v638 = vsub.f32 %v39, %v637
    %v639 = vand.u32 %v638, 4294901760
    %640 = vmatpush1.msra.mxu0 %v639
    %641 = vmatprep.subr.mxu0 0.0
    %642 = vmatpush1.msra.mxu0 0.0
    %643 = vmatprep.subr.mxu0 0.0
    %644 = vmatpush1.msra.mxu0 0.0
    %645 = vmatprep.subr.mxu0 0.0
    %646 = vmatpush1.msra.mxu0 0.0
    %647 = vmatprep.subr.mxu0 0.0
    %648 = vmatpush1.msra.mxu0 0.0
    %649 = vmatprep.subr.mxu0 0.0
    %650 = vmatpush1.msra.mxu0 0.0
    %651 = vmatprep.subr.mxu0 0.0
    %652 = vmatpush1.msra.mxu0 0.0
    %653 = vmatprep.subr.mxu0 0.0
    %654 = vmatpush1.msra.mxu0 0.0
    %655 = vmatprep.subr.mxu0 0.0
    %656 = vmatpush1.msra.mxu0 0.0
    %657 = vmatprep.subr.mxu0 0.0
    %658 = vmatpush1.msra.mxu0 0.0
    %659 = vmatprep.subr.mxu0 0.0
    %660 = vmatpush1.msra.mxu0 0.0
    %661 = vmatprep.subr.mxu0 0.0
    %662 = vmatpush1.msra.mxu0 0.0
    %663 = vmatprep.subr.mxu0 0.0
    %664 = vmatpush1.msra.mxu0 0.0
    %665 = vmatprep.subr.mxu0 0.0
    %666 = vmatpush1.msra.mxu0 0.0
    %667 = vmatprep.subr.mxu0 0.0
    %668 = vmatpush1.msra.mxu0 0.0
    %669 = vmatprep.subr.mxu0 0.0
    %670 = vmatpush1.msra.mxu0 0.0
    %671 = vmatprep.subr.mxu0 0.0
    %672 = vmatpush1.msra.mxu0 0.0
    %673 = vmatprep.mubr.f32.mxu0 0.0
    %v674 = vand.u32 %v65, 4294901760
    %675 = vmatmul.mubr.f32.gmra.mrb[0].mxu0 %v674
    %v676 = vpop.f32.mrb[0].mxu0
    %v677 = vadd.f32 %v550, %v676
    %v678 = vpop.f32.mrb[0].mxu0
    %679 = vmatprep.mubr.f32.mxu0 0.0
    %v680 = vand.u32 %v66, 4294901760
    %681 = vmatmul.mubr.f32.gmra.mrb[0].mxu0 %v680
    %v682 = vpop.f32.mrb[0].mxu0
    %v683 = vadd.f32 %v558, %v682
    %v684 = vpop.f32.mrb[0].mxu0
    %685 = vdwg.mxu0
    %686 = vmatprep.subr.mxu0 0.0
    %v687 = vand.u32 %v24, 4294901760
    %688 = vmatpush1.msra.mxu0 %v687
    %689 = vmatprep.subr.mxu0 0.0
    %v690 = vand.u32 %v25, 4294901760
    %691 = vmatpush1.msra.mxu0 %v690
    %692 = vmatprep.subr.mxu0 0.0
    %v693 = vand.u32 %v26, 4294901760
    %694 = vmatpush1.msra.mxu0 %v693
    %695 = vmatprep.subr.mxu0 0.0
    %v696 = vand.u32 %v27, 4294901760
    %697 = vmatpush1.msra.mxu0 %v696
    %698 = vmatprep.subr.mxu0 0.0
    %v699 = vand.u32 %v28, 4294901760
    %700 = vmatpush1.msra.mxu0 %v699
    %701 = vmatprep.subr.mxu0 0.0
    %v702 = vand.u32 %v29, 4294901760
    %703 = vmatpush1.msra.mxu0 %v702
    %704 = vmatprep.subr.mxu0 0.0
    %v705 = vand.u32 %v30, 4294901760
    %706 = vmatpush1.msra.mxu0 %v705
    %707 = vmatprep.subr.mxu0 0.0
    %v708 = vand.u32 %v31, 4294901760
    %709 = vmatpush1.msra.mxu0 %v708
    %710 = vmatprep.subr.mxu0 0.0
    %v711 = vand.u32 %v32, 4294901760
    %712 = vmatpush1.msra.mxu0 %v711
    %713 = vmatprep.subr.mxu0 0.0
    %v714 = vand.u32 %v33, 4294901760
    %715 = vmatpush1.msra.mxu0 %v714
    %716 = vmatprep.subr.mxu0 0.0
    %v717 = vand.u32 %v34, 4294901760
    %718 = vmatpush1.msra.mxu0 %v717
    %719 = vmatprep.subr.mxu0 0.0
    %v720 = vand.u32 %v35, 4294901760
    %721 = vmatpush1.msra.mxu0 %v720
    %722 = vmatprep.subr.mxu0 0.0
    %v723 = vand.u32 %v36, 4294901760
    %724 = vmatpush1.msra.mxu0 %v723
    %725 = vmatprep.subr.mxu0 0.0
    %v726 = vand.u32 %v37, 4294901760
    %727 = vmatpush1.msra.mxu0 %v726
    %728 = vmatprep.subr.mxu0 0.0
    %v729 = vand.u32 %v38, 4294901760
    %730 = vmatpush1.msra.mxu0 %v729
    %731 = vmatprep.subr.mxu0 0.0
    %v732 = vand.u32 %v39, 4294901760
    %733 = vmatpush1.msra.mxu0 %v732
    %734 = vmatprep.subr.mxu0 0.0
    %735 = vmatpush1.msra.mxu0 0.0
    %736 = vmatprep.subr.mxu0 0.0
    %737 = vmatpush1.msra.mxu0 0.0
    %738 = vmatprep.subr.mxu0 0.0
    %739 = vmatpush1.msra.mxu0 0.0
    %740 = vmatprep.subr.mxu0 0.0
    %741 = vmatpush1.msra.mxu0 0.0
    %742 = vmatprep.subr.mxu0 0.0
    %743 = vmatpush1.msra.mxu0 0.0
    %744 = vmatprep.subr.mxu0 0.0
    %745 = vmatpush1.msra.mxu0 0.0
    %746 = vmatprep.subr.mxu0 0.0
    %747 = vmatpush1.msra.mxu0 0.0
    %748 = vmatprep.subr.mxu0 0.0
    %749 = vmatpush1.msra.mxu0 0.0
    %750 = vmatprep.subr.mxu0 0.0
    %751 = vmatpush1.msra.mxu0 0.0
    %752 = vmatprep.subr.mxu0 0.0
    %753 = vmatpush1.msra.mxu0 0.0
    %754 = vmatprep.subr.mxu0 0.0
    %755 = vmatpush1.msra.mxu0 0.0
    %756 = vmatprep.subr.mxu0 0.0
    %757 = vmatpush1.msra.mxu0 0.0
    %758 = vmatprep.subr.mxu0 0.0
    %759 = vmatpush1.msra.mxu0 0.0
    %760 = vmatprep.subr.mxu0 0.0
    %761 = vmatpush1.msra.mxu0 0.0
    %762 = vmatprep.subr.mxu0 0.0
    %763 = vmatpush1.msra.mxu0 0.0
    %764 = vmatprep.subr.mxu0 0.0
    %765 = vmatpush1.msra.mxu0 0.0
    %766 = vmatprep.mubr.f32.mxu0 0.0
    %v767 = vand.u32 %v65, 4294901760
    %768 = vmatmul.mubr.f32.gmra.mrb[0].mxu0 %v767
    %v769 = vpop.f32.mrb[0].mxu0
    %v770 = vadd.f32 %v677, %v769
    %v771 = vpop.f32.mrb[0].mxu0
    %772 = vmatprep.mubr.f32.mxu0 0.0
    %v773 = vand.u32 %v66, 4294901760
    %774 = vmatmul.mubr.f32.gmra.mrb[0].mxu0 %v773
    %v775 = vpop.f32.mrb[0].mxu0
    %v776 = vadd.f32 %v683, %v775
    %v777 = vpop.f32.mrb[0].mxu0
    %778 = vdwg.mxu0
    %v779 = vsub.f32 %v22, %v770
    %v780 = vsub.f32 %v23, %v776
    %v781 = vmul.f32 %v779, %v779
    %v782 = vmul.f32 %v780, %v780
    %vm783 = vcmask 261120
    %v784 = vsel %vm783, %v781, 0.0
    %785 = vadd.xlane.f32.xlu0 %v784
    %v786 = vpop.xlane.xlu0 %785
    %v787 = vsel %vm783, %v782, 0.0
    %788 = vadd.xlane.f32.xlu0 %v787
    %v789 = vpop.xlane.xlu0 %788
    %v790 = vmul.f32 %v93, %v51
    %v791 = vmul.f32 %v94, %v52
    %vm792 = vcmask 7168
    %v793 = vsel %vm792, %v790, 0.0
    %v794 = vsel %vm792, %v791, 0.0
    %v795 = vadd.f32 %v793, %v794
    %796 = vadd.xlane.f32.xlu0 %v795
    %v797 = vpop.xlane.xlu0 %796
    %v798 = vrot.slane %v797, 4
    %v799 = vadd.f32 %v797, %v798
    %v800 = vrot.slane %v799, 2
    %v801 = vadd.f32 %v799, %v800
    %v802 = vrot.slane %v801, 1
    %v803 = vadd.f32 %v801, %v802
    %s804 = vtos %v803
    %v805 = vmul.f32 %v786, %v51
    %v806 = vmul.f32 %v789, %v52
    %v807 = vsel %vm792, %v805, 0.0
    %v808 = vsel %vm792, %v806, 0.0
    %v809 = vadd.f32 %v807, %v808
    %810 = vadd.xlane.f32.xlu0 %v809
    %v811 = vpop.xlane.xlu0 %810
    %v812 = vrot.slane %v811, 4
    %v813 = vadd.f32 %v811, %v812
    %v814 = vrot.slane %v813, 2
    %v815 = vadd.f32 %v813, %v814
    %v816 = vrot.slane %v815, 1
    %v817 = vadd.f32 %v815, %v816
    %s818 = vtos %v817
    %vm819 = vcmp.eq.s32.totalorder %v54, 0
    %v820 = vstv %s804
    %v821 = vsel %vm819, %v820, 0.0
    %vm822 = vcmp.eq.s32.totalorder %v54, 1
    %v823 = vstv %s818
    %v824 = vsel %vm822, %v823, 0.0
    %v825 = vadd.f32 %v821, %v824
    %826 = vst [vmem:[#allocation2] sm:$0x1] %v825
    // Predicated region
    $region18: #{tpu_custom_call.1} parent=1 // pred_check
      _
    $region19: #{tpu_custom_call.1} parent=1 // pred_check_branch
      %828 = sbr.rel (0) target = $region21
    $region20: #{tpu_custom_call.1} parent=1 // pred_region
      %s830 = ssub.s32 16, 16
      %831 = vsyncadd [#allocation3], %s830
      %s833 = sshll.u32 [#allocation2], 4
      %s834 = int_to_ptr.vmem [resolvable:$true] %s833
      %836 = dma.vmem_to_hbm [thread:$0]  %s834, 16, %s4, [#allocation3]
    $region21: #{tpu_custom_call.1} parent=1 // pred_fallthru
      _
    // Predicated region
    $region22: #{tpu_custom_call.1} parent=1 // pred_check
      _
    $region23: #{tpu_custom_call.1} parent=1 // pred_check_branch
      %838 = sbr.rel (0) target = $region25
    $region24: #{tpu_custom_call.1} parent=1 // pred_region
      %839 = dma.done [#allocation3], 16
    $region25: #{tpu_custom_call.1} parent=1 // pred_fallthru
      _
    %840 = vsyncpa [#allocation3], 1

</llo_original>
